<compile_context>
chip_gen: v7x
topology: tpu7x:2x2x1
jax: 0.10.0
libtpu: 0.0.40
codegen_flags: <defaults>
</compile_context>

<pallas_src>
import jax
import jax.numpy as jnp
from jax.experimental import pallas as pl
from jax.experimental.pallas import tpu as pltpu


def _round_up(x, m):
    return ((x + m - 1) // m) * m


def convbn_kernel(patches_ref, w_ref, bias_ref, out_ref, acc_ref):
    # K-reduction accumulator (P3): zero-init on first K step, epilogue on last.
    @pl.when(pl.program_id(2) == 0)
    def _():
        acc_ref[...] = jnp.zeros_like(acc_ref)

    # bf16 x bf16 -> f32 on the MXU, accumulated in VMEM scratch.
    acc_ref[...] += jnp.dot(patches_ref[...], w_ref[...],
                            preferred_element_type=jnp.float32)

    @pl.when(pl.program_id(2) == pl.num_programs(2) - 1)
    def _():
        # BN scale is pre-folded into the weights; only bias-add + ReLU remain (all f32).
        y = acc_ref[...] + bias_ref[...]
        out_ref[...] = jnp.maximum(y, 0.0).astype(out_ref.dtype)


def conv_bn_relu(x_nchw, weight, gamma, beta, running_mean, running_var, eps=1e-5):
    """ConvBN forward.  x_nchw: [N, Cin, H, W]; weight: [Cout, Cin, 7, 7]."""
    N, Cin, H, W = x_nchw.shape
    Cout = weight.shape[0]
    KH = KW = 7
    S, P = 2, 3
    Ho = (H + 2 * P - KH) // S + 1
    Wo = (W + 2 * P - KW) // S + 1

    M = N * Ho * Wo
    K = Cin * KH * KW

    # ---- im2col (pure reshuffle, done in bf16 to halve the expanded-matrix HBM traffic) ----
    # TODO(synk): for large spatial sizes, move im2col into the kernel (x in HBM via
    # memory_space=pl.ANY + manual row-band DMA) to avoid the ~12x expanded HBM round-trip.
    xp = jnp.pad(x_nchw.astype(jnp.bfloat16), ((0, 0), (0, 0), (P, P), (P, P)))
    cols = []
    for kh in range(KH):
        for kw in range(KW):
            cols.append(xp[:, :, kh:kh + S * Ho:S, kw:kw + S * Wo:S])   # [N,Cin,Ho,Wo]
    # K ordering is (cin, kh, kw), matching weight.reshape(Cout, K).
    patches = jnp.stack(cols, axis=2).transpose(0, 3, 4, 1, 2).reshape(M, K)

    # ---- fold BatchNorm (inference / running stats) into the weights + a bias -------------
    # TODO(synk): training-mode BN (batch statistics + running-stat update) not implemented.
    scale = (gamma / jnp.sqrt(running_var + eps)).astype(jnp.float32)          # [Cout]
    bias = (beta - running_mean * scale).astype(jnp.float32)                   # [Cout]
    w_mat = (weight.reshape(Cout, K).astype(jnp.float32) * scale[:, None]).T   # [K, Cout] f32

    # ---- tile sizes (lane-dense, VMEM-budgeted: fits v7x 32 MiB scoped with margin) --------
    TM = 512
    if M < 2 * TM:
        # Small problem: still expose >=2 parallel M blocks when possible (v7x: 2 TCs/chip).
        TM = max(8, _round_up(M, 16) // 2)
    Mp = _round_up(M, TM)

    Coutp = _round_up(Cout, 128)
    TN = 256 if Coutp % 256 == 0 else 128

    TK = min(512, _round_up(K, 128))
    Kp = _round_up(K, TK)

    # Zero-pad operands (zeros are exact: they contribute 0 to the accumulation and the
    # padded output rows/columns are sliced away below).
    patches_p = jnp.pad(patches, ((0, Mp - M), (0, Kp - K)))                    # bf16
    w_p = jnp.pad(w_mat, ((0, Kp - K), (0, Coutp - Cout))).astype(jnp.bfloat16)
    bias_p = jnp.pad(bias, (0, Coutp - Cout)).reshape(1, Coutp)                 # f32

    grid = (Mp // TM, Coutp // TN, Kp // TK)

    cost = pl.CostEstimate(
        flops=2 * Mp * Kp * Coutp,
        transcendentals=0,
        bytes_accessed=Mp * Kp * 2 + Kp * Coutp * 2 + Coutp * 4 + Mp * Coutp * 4,
    )

    out = pl.pallas_call(
        convbn_kernel,
        out_shape=jax.ShapeDtypeStruct((Mp, Coutp), jnp.float32),
        grid_spec=pltpu.PrefetchScalarGridSpec(
            num_scalar_prefetch=0,
            grid=grid,
            in_specs=[
                pl.BlockSpec((TM, TK), lambda i, j, k: (i, k)),   # patches tile
                pl.BlockSpec((TK, TN), lambda i, j, k: (k, j)),   # (scaled) weight tile
                pl.BlockSpec((1, TN), lambda i, j, k: (0, j)),    # folded BN bias
            ],
            out_specs=pl.BlockSpec((TM, TN), lambda i, j, k: (i, j)),
            scratch_shapes=[pltpu.VMEM((TM, TN), jnp.float32)],
        ),
        compiler_params=pltpu.CompilerParams(
            dimension_semantics=("parallel", "parallel", "arbitrary"),
        ),
        cost_estimate=cost,
    )(patches_p, w_p, bias_p)

    # Strip padding, then [M, Cout] -> [N, Ho, Wo, Cout] -> NCHW (PyTorch layout).
    # TODO(synk): keep NHWC between layers at the model level to avoid this transpose pass.
    return out[:M, :Cout].reshape(N, Ho, Wo, Cout).transpose(0, 3, 1, 2)


if __name__ == "__main__":
    # Small shapes consistent with the module: batch=2, inp=4, oup=8, spatial=16.
    N, Cin, Cout, H, W = 2, 4, 8, 16, 16

    key = jax.random.PRNGKey(0)
    kx, kw, kg, kb = jax.random.split(key, 4)

    x = jax.random.normal(kx, (N, Cin, H, W), dtype=jnp.float32)

    # Deterministic parameter init (PyTorch Conv2d default: U(-b, b), b = 1/sqrt(fan_in)).
    fan_in = Cin * 7 * 7
    bound = 1.0 / (fan_in ** 0.5)
    weight = jax.random.uniform(kw, (Cout, Cin, 7, 7), jnp.float32, -bound, bound)

    # BatchNorm params (perturbed from defaults so BN is non-trivial).
    gamma = 1.0 + 0.1 * jax.random.normal(kg, (Cout,), jnp.float32)
    beta = 0.1 * jax.random.normal(kb, (Cout,), jnp.float32)
    running_mean = jnp.zeros((Cout,), jnp.float32)
    running_var = jnp.ones((Cout,), jnp.float32)

    out = conv_bn_relu(x, weight, gamma, beta, running_mean, running_var)
    out = jax.block_until_ready(out)

    assert out.shape == (N, Cout, H // 2, W // 2), out.shape
    assert bool(jnp.all(out >= 0.0))  # ReLU invariant
    print("KERNEL_OK")
</pallas_src>

<mosaic_0001>
module attributes {stable_mosaic.version = 11 : i64} {
  func.func @convbn_kernel(%arg0: i32, %arg1: i32, %arg2: i32, %arg3: memref<64x256xbf16, #tpu.memory_space<vmem>>, %arg4: memref<256x128xbf16, #tpu.memory_space<vmem>>, %arg5: memref<1x128xf32, #tpu.memory_space<vmem>>, %arg6: memref<64x128xf32, #tpu.memory_space<vmem>>, %arg7: memref<64x128xf32, #tpu.memory_space<vmem>>) attributes {dimension_semantics = [#tpu.dimension_semantics<parallel>, #tpu.dimension_semantics<parallel>, #tpu.dimension_semantics<arbitrary>], iteration_bounds = array<i64: 2, 1, 1>, scalar_prefetch = 0 : i64, scratch_operands = 1 : i64, tpu.core_type = #tpu.core_type<tc>, window_params = [{transform_indices = @transform_0, window_bounds = array<i64: 64, 256>}, {transform_indices = @transform_1, window_bounds = array<i64: 256, 128>}, {transform_indices = @transform_2, window_bounds = array<i64: 1, 128>}, {transform_indices = @transform_3, window_bounds = array<i64: 64, 128>}]} {
    %c0_i32 = arith.constant 0 : i32
    %0 = arith.cmpi eq, %arg2, %c0_i32 : i32
    %1 = arith.extui %0 : i1 to i32
    %c0_i32_0 = arith.constant 0 : i32
    %2 = arith.cmpi ne, %1, %c0_i32_0 : i32
    scf.if %2 {
      %cst_10 = arith.constant 0.000000e+00 : f32
      %12 = vector.broadcast %cst_10 : f32 to vector<64x128xf32>
      %c0_11 = arith.constant 0 : index
      %c0_12 = arith.constant 0 : index
      %13 = vector.load %arg7[%c0_11, %c0_12] : memref<64x128xf32, #tpu.memory_space<vmem>>, vector<64x128xf32>
      tpu.vector_store %arg7[%c0_11, %c0_12], %12 {strides = array<i32>} : memref<64x128xf32, #tpu.memory_space<vmem>>, vector<64x128xf32>,
    } else {
    }
    %c0 = arith.constant 0 : index
    %c0_1 = arith.constant 0 : index
    %3 = vector.load %arg7[%c0, %c0_1] : memref<64x128xf32, #tpu.memory_space<vmem>>, vector<64x128xf32>
    %c0_2 = arith.constant 0 : index
    %c0_3 = arith.constant 0 : index
    %4 = vector.load %arg3[%c0_2, %c0_3] : memref<64x256xbf16, #tpu.memory_space<vmem>>, vector<64x256xbf16>
    %c0_4 = arith.constant 0 : index
    %c0_5 = arith.constant 0 : index
    %5 = vector.load %arg4[%c0_4, %c0_5] : memref<256x128xbf16, #tpu.memory_space<vmem>>, vector<256x128xbf16>
    %cst = arith.constant dense<0.000000e+00> : vector<64x128xf32>
    %6 = tpu.matmul %4, %5, %cst {dimension_numbers = #tpu.dot_dimension_numbers<[1], [0], [0], [1], [0, 0, 1, 1], [], []>} : vector<64x256xbf16>, vector<256x128xbf16>, vector<64x128xf32> -> vector<64x128xf32>
    %7 = arith.addf %3, %6 : vector<64x128xf32>
    %c0_6 = arith.constant 0 : index
    %c0_7 = arith.constant 0 : index
    %8 = vector.load %arg7[%c0_6, %c0_7] : memref<64x128xf32, #tpu.memory_space<vmem>>, vector<64x128xf32>
    tpu.vector_store %arg7[%c0_6, %c0_7], %7 {strides = array<i32>} : memref<64x128xf32, #tpu.memory_space<vmem>>, vector<64x128xf32>,
    %c0_i32_8 = arith.constant 0 : i32
    %9 = arith.cmpi eq, %arg2, %c0_i32_8 : i32
    %10 = arith.extui %9 : i1 to i32
    %c0_i32_9 = arith.constant 0 : i32
    %11 = arith.cmpi ne, %10, %c0_i32_9 : i32
    scf.if %11 {
      %c0_10 = arith.constant 0 : index
      %c0_11 = arith.constant 0 : index
      %12 = vector.load %arg7[%c0_10, %c0_11] : memref<64x128xf32, #tpu.memory_space<vmem>>, vector<64x128xf32>
      %c0_12 = arith.constant 0 : index
      %c0_13 = arith.constant 0 : index
      %13 = vector.load %arg5[%c0_12, %c0_13] : memref<1x128xf32, #tpu.memory_space<vmem>>, vector<1x128xf32>
      %14 = vector.broadcast %13 : vector<1x128xf32> to vector<64x128xf32>
      %15 = arith.addf %12, %14 : vector<64x128xf32>
      %cst_14 = arith.constant 0.000000e+00 : f32
      %16 = vector.broadcast %cst_14 : f32 to vector<64x128xf32>
      %17 = arith.maximumf %15, %16 : vector<64x128xf32>
      %c0_15 = arith.constant 0 : index
      %c0_16 = arith.constant 0 : index
      %18 = vector.load %arg6[%c0_15, %c0_16] : memref<64x128xf32, #tpu.memory_space<vmem>>, vector<64x128xf32>
      tpu.vector_store %arg6[%c0_15, %c0_16], %17 {strides = array<i32>} : memref<64x128xf32, #tpu.memory_space<vmem>>, vector<64x128xf32>,
    } else {
    }
    return
  }
  func.func @transform_0(%arg0: i32, %arg1: i32, %arg2: i32) -> (i32, i32) {
    %c0_i32 = arith.constant 0 : i32
    return %arg0, %arg2 : i32, i32
  }
  func.func @transform_1(%arg0: i32, %arg1: i32, %arg2: i32) -> (i32, i32) {
    %c0_i32 = arith.constant 0 : i32
    return %arg2, %arg1 : i32, i32
  }
  func.func @transform_2(%arg0: i32, %arg1: i32, %arg2: i32) -> (i32, i32) {
    %c0_i32 = arith.constant 0 : i32
    %c0_i32_0 = arith.constant 0 : i32
    return %c0_i32, %arg1 : i32, i32
  }
  func.func @transform_3(%arg0: i32, %arg1: i32, %arg2: i32) -> (i32, i32) {
    %c0_i32 = arith.constant 0 : i32
    return %arg0, %arg1 : i32, i32
  }
}

</mosaic_0001>

<llo_original>
// kernel: tpu_custom_call.1
$region0: #{tpu_custom_call.1}
  #allocation0 [shape = 'u32[]', space=smem, size = 0x4, offset = 0x4, fixed_abs, tag = 'smem constant byte address 0x4 - core index']
  #allocation1 [shape = 'u32[144,128]{1,0:T(1,128)}', space=vmem, size = 0x12000, scoped, tag = 'internal scratch']
  #allocation2 [shape = 'f32[64,128]{1,0:T(8,128)}', space=vmem, size = 0x8000, scoped, tag = 'scratch operand']
  %s0 = inlined_call_operand.hbm [shape: bf16[128,256], index: 0, kind: input, shape index: {}]
  %s1 = inlined_call_operand.hbm [shape: bf16[256,128], index: 1, kind: input, shape index: {}]
  %s2 = inlined_call_operand.vmem [shape: f32[1,128], index: 2, kind: input, shape index: {}]
  %s3 = inlined_call_operand.hbm [shape: f32[128,128], index: 3, kind: output, shape index: {}]
  %s4 = sld [smem:[#allocation0]]
  $region61: #{tpu_custom_call.1} parent=0
    _
  %s6 = ssub.s32 1, %s4
  %s7 = scalar_select 0, %s6, %s4
  $region1: #{tpu_custom_call.1} parent=0
    #allocation3 [shape = 'u8[65536]{0}', space=vmem, size = 0x10000, scoped, tag = 'input window, operand 0']
    #allocation4 [shape = 's32[2]{0}', space=sflag, size = 0x8, scoped, tag = 'scoped memory for tpu_custom_call.1']
    #allocation5 [shape = 's32[2]{0}', space=sflag, size = 0x8, scoped, tag = 'scoped memory for tpu_custom_call.1']
    #allocation6 [shape = 'u8[65536]{0}', space=vmem, size = 0x10000, scoped, tag = 'input window, operand 1, single buffered']
    #allocation7 [shape = 's32[1]{0}', space=sflag, size = 0x4, scoped, tag = 'scoped memory for tpu_custom_call.1']
    #allocation8 [shape = 'u8[65536]{0}', space=vmem, size = 0x10000, scoped, tag = 'output window, operand 0']
    %8 = vsyncpa [#allocation4], 0
    %s9 = scalar_lea.sflag [#allocation4], 1
    %10 = vsyncpa %s9, 0
    %11 = vsyncpa [#allocation7], 0
    %12 = vsyncpa [#allocation5], 0
    %s13 = scalar_lea.sflag [#allocation5], 1
    %14 = vsyncpa %s13, 0
    loop: start=0, step=1, limit=4
    $region2: #{tpu_custom_call.1} parent=1 // loop_pre_header
      _
    $region3: #{tpu_custom_call.1} parent=1 // loop_header
      %s16 = sphi 0, %s20
      %p17 = scmp.ge.s32.totalorder %s16, 4
      %s23 = sphi 0, %s42
      %s24 = sphi 0, %s38
      %s25 = sphi 0, %s34
      %s26 = sphi 0, %s23
      %s27 = sphi 0, %s24
      %s28 = sphi 0, %s25
      %s29 = sphi 0, %s26
      %s30 = sphi 0, %s27
      %s31 = sphi 0, %s28
      %s47 = sphi 0, %s49
      %s50 = sphi 0, %s47
      %s51 = sphi 0, %s50
      %s67 = sphi 0, %s51
      %s75 = sphi 0, %s77
      %s78 = sphi 0, %s75
      %s79 = sphi 0, %s78
      %s95 = sphi 0, %s79
      %s101 = sphi 0, %s103
      %s104 = sphi 0, %s101
      %s105 = sphi 0, %s104
      %s121 = sphi 0, %s105
      %s129 = sphi 0, %s131
      %s132 = sphi 0, %s129
      %s133 = sphi 0, %s132
      %s149 = sphi 0, %s133
    $region4: #{tpu_custom_call.1} parent=1 // loop_header_branch
      %19 = sbr.rel (%p17) target = $region8
    $region5: #{tpu_custom_call.1} parent=1 // loop_body
      %s21 = ssub.s32 %s16, 1
      %s22 = ssub.s32 %s16, 2
      %s32 = sadd.s32 1, %s25
      %p33 = scmp.ge.s32.totalorder %s32, 1
      %s34 = scalar_select %p33, 0, %s32
      %s35 = sadd.s32 1, %s24
      %s36 = scalar_select %p33, %s35, %s24
      %p37 = scmp.ge.s32.totalorder %s36, 1
      %s38 = scalar_select %p37, 0, %s36
      %s39 = sadd.s32 1, %s23
      %s40 = scalar_select %p37, %s39, %s23
      %p41 = scmp.ge.s32.totalorder %s40, 2
      %s42 = scalar_select %p41, 0, %s40
      %s43 = ssub.s32 %s23, %s42
      %s44 = ssub.s32 %s25, %s34
      %s45 = sor.u32 %s43, %s44
      %p46 = scmp.eq.s32.totalorder %s45, 0
      %s48 = sadd.s32 %s47, 1
      %s49 = scalar_select %p46, %s47, %s48
      %p52 = pneg %p46
      %p53 = scmp.eq.s32.totalorder %s16, 1
      %p54 = por %p52, %p53
      %p55 = scmp.ne.s32.totalorder %s47, %s50
      %p56 = scmp.eq.s32.totalorder %s16, 0
      %p57 = por %p55, %p56
      %p58 = scmp.ne.s32.totalorder %s47, %s50
      %p59 = scmp.eq.s32.totalorder %s21, 1
      %p60 = por %p58, %p59
      %p61 = scmp.ne.s32.totalorder %s50, %s51
      %p62 = scmp.eq.s32.totalorder %s21, 0
      %p63 = por %p61, %p62
      %p64 = scmp.ne.s32.totalorder %s50, %s51
      %p65 = scmp.eq.s32.totalorder %s22, 1
      %p66 = por %p64, %p65
      %p68 = scmp.ne.s32.totalorder %s51, %s67
      %p69 = scmp.eq.s32.totalorder %s22, 0
      %p70 = por %p68, %p69
      %s71 = ssub.s32 %s25, %s34
      %s72 = ssub.s32 %s24, %s38
      %s73 = sor.u32 %s71, %s72
      %p74 = scmp.eq.s32.totalorder %s73, 0
      %s76 = sadd.s32 %s75, 1
      %s77 = scalar_select %p74, %s75, %s76
      %p80 = pneg %p74
      %p81 = scmp.eq.s32.totalorder %s16, 1
      %p82 = por %p80, %p81
      %p83 = scmp.ne.s32.totalorder %s75, %s78
      %p84 = scmp.eq.s32.totalorder %s16, 0
      %p85 = por %p83, %p84
      %p86 = scmp.ne.s32.totalorder %s75, %s78
      %p87 = scmp.eq.s32.totalorder %s21, 1
      %p88 = por %p86, %p87
      %p89 = scmp.ne.s32.totalorder %s78, %s79
      %p90 = scmp.eq.s32.totalorder %s21, 0
      %p91 = por %p89, %p90
      %p92 = scmp.ne.s32.totalorder %s78, %s79
      %p93 = scmp.eq.s32.totalorder %s22, 1
      %p94 = por %p92, %p93
      %p96 = scmp.ne.s32.totalorder %s79, %s95
      %p97 = scmp.eq.s32.totalorder %s22, 0
      %p98 = por %p96, %p97
      %s99 = ssub.s32 %s24, %s38
      %p100 = scmp.eq.s32.totalorder %s99, 0
      %s102 = sadd.s32 %s101, 1
      %s103 = scalar_select %p100, %s101, %s102
      %p106 = pneg %p100
      %p107 = scmp.eq.s32.totalorder %s16, 1
      %p108 = por %p106, %p107
      %p109 = scmp.ne.s32.totalorder %s101, %s104
      %p110 = scmp.eq.s32.totalorder %s16, 0
      %p111 = por %p109, %p110
      %p112 = scmp.ne.s32.totalorder %s101, %s104
      %p113 = scmp.eq.s32.totalorder %s21, 1
      %p114 = por %p112, %p113
      %p115 = scmp.ne.s32.totalorder %s104, %s105
      %p116 = scmp.eq.s32.totalorder %s21, 0
      %p117 = por %p115, %p116
      %p118 = scmp.ne.s32.totalorder %s104, %s105
      %p119 = scmp.eq.s32.totalorder %s22, 1
      %p120 = por %p118, %p119
      %p122 = scmp.ne.s32.totalorder %s105, %s121
      %p123 = scmp.eq.s32.totalorder %s22, 0
      %p124 = por %p122, %p123
      %s125 = ssub.s32 %s23, %s42
      %s126 = ssub.s32 %s24, %s38
      %s127 = sor.u32 %s125, %s126
      %p128 = scmp.eq.s32.totalorder %s127, 0
      %s130 = sadd.s32 %s129, 1
      %s131 = scalar_select %p128, %s129, %s130
      %p134 = pneg %p128
      %p135 = scmp.eq.s32.totalorder %s16, 1
      %p136 = por %p134, %p135
      %p137 = scmp.ne.s32.totalorder %s129, %s132
      %p138 = scmp.eq.s32.totalorder %s16, 0
      %p139 = por %p137, %p138
      %p140 = scmp.ne.s32.totalorder %s129, %s132
      %p141 = scmp.eq.s32.totalorder %s21, 1
      %p142 = por %p140, %p141
      %p143 = scmp.ne.s32.totalorder %s132, %s133
      %p144 = scmp.eq.s32.totalorder %s21, 0
      %p145 = por %p143, %p144
      %p146 = scmp.ne.s32.totalorder %s132, %s133
      %p147 = scmp.eq.s32.totalorder %s22, 1
      %p148 = por %p146, %p147
      %p150 = scmp.ne.s32.totalorder %s133, %s149
      %p151 = scmp.eq.s32.totalorder %s22, 0
      %p152 = por %p150, %p151
      %p153 = scmp.le.s32.totalorder 1, %s16
      %p154 = scmp.lt.s32.totalorder %s16, 3
      %p155 = pnand %p153, %p154
      %p156 = pneg %p155
      // Predicated region
      $region9: #{tpu_custom_call.1} parent=5 // pred_check
        _
      $region10: #{tpu_custom_call.1} parent=5 // pred_check_branch
        %158 = sbr.rel (%p155) target = $region12
      $region11: #{tpu_custom_call.1} parent=5 // pred_region
        %s159 = ssub.s32 %s16, 1
        // Predicated region
        $region13: #{tpu_custom_call.1} parent=11 // pred_check
          %p160 = pneg %p91
        $region14: #{tpu_custom_call.1} parent=11 // pred_check_branch
          %162 = sbr.rel (%p160) target = $region16
        $region15: #{tpu_custom_call.1} parent=11 // pred_region
          %s163 = smul.u32 32, %s28
          %s165 = ssub.s32 2048, 2048
          %166 = vsyncadd [#allocation7], %s165
          %s167 = sadd.s32 %s27, %s163
          %s168 = smul.addr %s167, 64
          %s169 = scalar_lea.hbm %s1, %s168
          %s170 = sshll.u32 [#allocation6], 4
          %s171 = int_to_ptr.vmem [resolvable:$true] %s170
          %176 = dma.hbm_to_vmem [thread:$0]  %s169, 2048, %s171, [#allocation7], 64, 64, 4
        $region16: #{tpu_custom_call.1} parent=11 // pred_fallthru
          _
        // Predicated region
        $region17: #{tpu_custom_call.1} parent=11 // pred_check
          %p177 = pneg %p117
        $region18: #{tpu_custom_call.1} parent=11 // pred_check_branch
          %179 = sbr.rel (%p177) target = $region20
        $region19: #{tpu_custom_call.1} parent=11 // pred_region
          %p180 = scmp.lt.s32.totalorder %s27, 0
          %s181 = scalar_select %p180, %s27, 0
          %s182 = scalar_lea.vmem %s2, %s181
        $region20: #{tpu_custom_call.1} parent=11 // pred_fallthru
          _
      $region12: #{tpu_custom_call.1} parent=5 // pred_fallthru
        _
      %p183 = scmp.lt.s32.totalorder %s16, 2
      // Predicated region
      $region21: #{tpu_custom_call.1} parent=5 // pred_check
        %p184 = pneg %p183
      $region22: #{tpu_custom_call.1} parent=5 // pred_check_branch
        %186 = sbr.rel (%p184) target = $region24
      $region23: #{tpu_custom_call.1} parent=5 // pred_region
        // Predicated region
        $region25: #{tpu_custom_call.1} parent=23 // pred_check
          %p187 = pneg %p57
        $region26: #{tpu_custom_call.1} parent=23 // pred_check_branch
          %189 = sbr.rel (%p187) target = $region28
        $region27: #{tpu_custom_call.1} parent=23 // pred_region
          %s190 = sand.u32 %s47, 1
          %s191 = scalar_lea.sflag [#allocation4], %s190
          %s192 = sand.u32 %s47, 1
          %s193 = smul.addr %s192, 64
          %s194 = scalar_lea.vmem [#allocation3], %s193
          %s195 = smul.u32 8, %s23
          %s196 = smul.u32 2, %s25
          %s198 = ssub.s32 1024, 1024
          %199 = vsyncadd %s191, %s198
          %s200 = smul.addr %s195, 2
          %s201 = sadd.s32 %s196, %s200
          %s202 = smul.addr %s201, 64
          %s203 = scalar_lea.hbm %s0, %s202
          %s204 = sshll.u32 %s194, 4
          %s205 = int_to_ptr.vmem [resolvable:$true] %s204
          %210 = dma.hbm_to_vmem [thread:$0]  %s203, 1024, %s205, %s191, 128, 128, 8
        $region28: #{tpu_custom_call.1} parent=23 // pred_fallthru
          _
      $region24: #{tpu_custom_call.1} parent=5 // pred_fallthru
        _
      %p211 = scmp.le.s32.totalorder 1, %s16
      %p212 = scmp.lt.s32.totalorder %s16, 3
      %p213 = pnand %p211, %p212
      %p214 = pneg %p213
      // Predicated region
      $region29: #{tpu_custom_call.1} parent=5 // pred_check
        _
      $region30: #{tpu_custom_call.1} parent=5 // pred_check_branch
        %216 = sbr.rel (%p213) target = $region32
      $region31: #{tpu_custom_call.1} parent=5 // pred_region
        %s217 = ssub.s32 %s16, 1
        %s218 = sand.u32 %s50, 1
        %s219 = scalar_lea.sflag [#allocation4], %s218
        %s220 = sand.u32 %s50, 1
        %s221 = smul.addr %s220, 64
        %s222 = scalar_lea.vmem [#allocation3], %s221
        // Predicated region
        $region33: #{tpu_custom_call.1} parent=31 // pred_check
          %p223 = pneg %p63
        $region34: #{tpu_custom_call.1} parent=31 // pred_check_branch
          %225 = sbr.rel (%p223) target = $region36
        $region35: #{tpu_custom_call.1} parent=31 // pred_region
          %226 = dma.done %s219, 1024
        $region36: #{tpu_custom_call.1} parent=31 // pred_fallthru
          _
        // Predicated region
        $region37: #{tpu_custom_call.1} parent=31 // pred_check
          %p227 = pneg %p91
        $region38: #{tpu_custom_call.1} parent=31 // pred_check_branch
          %229 = sbr.rel (%p227) target = $region40
        $region39: #{tpu_custom_call.1} parent=31 // pred_region
          %230 = dma.done [#allocation7], 2048
        $region40: #{tpu_custom_call.1} parent=31 // pred_fallthru
          _
        %s231 = sand.u32 %s50, 1
        %s232 = scalar_lea.sflag [#allocation4], %s231
        %s233 = sand.u32 %s50, 1
        %s234 = smul.addr %s233, 64
        %s235 = scalar_lea.vmem [#allocation3], %s234
        %p236 = pneg %p63
        %p237 = pneg %p60
        %p238 = pneg %p91
        %p239 = pneg %p88
        %p240 = scmp.lt.s32.totalorder %s27, 0
        %s241 = scalar_select %p240, %s27, 0
        %s242 = scalar_lea.vmem %s2, %s241
        %p243 = pneg %p117
        %p244 = pneg %p114
        %p245 = pneg %p145
        %p246 = pneg %p142
        %s247 = sand.u32 %s132, 1
        %s248 = scalar_lea.sflag [#allocation5], %s247
        %s249 = sand.u32 %s132, 1
        %s250 = smul.addr %s249, 64
        %s251 = scalar_lea.vmem [#allocation8], %s250
        %s252 = smul.u32 8, %s26
        %s253 = smul.u32 2, %s28
        %s254 = smul.u32 32, %s28
        %p255 = scmp.lt.s32.totalorder %s27, 0
        %s256 = scalar_select %p255, %s27, 0
        %s257 = scalar_lea.vmem %s2, %s256
        %s258 = smul.u32 8, %s26
        %p260 = scmp.eq.s32.totalorder %s28, 0
        // Predicated region
        $region41: #{tpu_custom_call.1} parent=31 // pred_check
          %p261 = pneg %p260
        $region42: #{tpu_custom_call.1} parent=31 // pred_check_branch
          %263 = sbr.rel (%p261) target = $region44
        $region43: #{tpu_custom_call.1} parent=31 // pred_region
          %264 = vst [vmem:[#allocation2] sm:$0xff] 0.0
          %265 = vst [vmem:[#allocation2 + $0x8] sm:$0xff] 0.0
          %266 = vst [vmem:[#allocation2 + $0x10] sm:$0xff] 0.0
          %267 = vst [vmem:[#allocation2 + $0x18] sm:$0xff] 0.0
          %268 = vst [vmem:[#allocation2 + $0x20] sm:$0xff] 0.0
          %269 = vst [vmem:[#allocation2 + $0x28] sm:$0xff] 0.0
          %270 = vst [vmem:[#allocation2 + $0x30] sm:$0xff] 0.0
          %271 = vst [vmem:[#allocation2 + $0x38] sm:$0xff] 0.0
        $region44: #{tpu_custom_call.1} parent=31 // pred_fallthru
          _
        %v272 = vld [vmem:[#allocation2] sm:$0xff]
        %v273 = vld [vmem:[#allocation2 + $0x8] sm:$0xff]
        %v274 = vld [vmem:[#allocation2 + $0x10] sm:$0xff]
        %v275 = vld [vmem:[#allocation2 + $0x18] sm:$0xff]
        %v276 = vld [vmem:[#allocation2 + $0x20] sm:$0xff]
        %v277 = vld [vmem:[#allocation2 + $0x28] sm:$0xff]
        %v278 = vld [vmem:[#allocation2 + $0x30] sm:$0xff]
        %v279 = vld [vmem:[#allocation2 + $0x38] sm:$0xff]
        %v280 = vld [vmem:[%s222] sm:$0xff]
        %v281 = vld [vmem:[%s222 + $0x8] sm:$0xff]
        %v282 = vld [vmem:[%s222 + $0x10] sm:$0xff]
        %v283 = vld [vmem:[%s222 + $0x18] sm:$0xff]
        %v284 = vld [vmem:[%s222 + $0x20] sm:$0xff]
        %v285 = vld [vmem:[%s222 + $0x28] sm:$0xff]
        %v286 = vld [vmem:[%s222 + $0x30] sm:$0xff]
        %v287 = vld [vmem:[%s222 + $0x38] sm:$0xff]
        %v288 = vld [vmem:[#allocation6] sm:$0xf]
        %v289 = vld [vmem:[#allocation6 + $0x4] sm:$0xf]
        %v290 = vld [vmem:[#allocation6 + $0x8] sm:$0xf]
        %v291 = vld [vmem:[#allocation6 + $0xc] sm:$0xf]
        %v292 = vld [vmem:[#allocation6 + $0x10] sm:$0xf]
        %v293 = vld [vmem:[#allocation6 + $0x14] sm:$0xf]
        %v294 = vld [vmem:[#allocation6 + $0x18] sm:$0xf]
        %v295 = vld [vmem:[#allocation6 + $0x1c] sm:$0xf]
        %v296 = vld [vmem:[#allocation6 + $0x20] sm:$0xf]
        %v297 = vld [vmem:[#allocation6 + $0x24] sm:$0xf]
        %v298 = vld [vmem:[#allocation6 + $0x28] sm:$0xf]
        %v299 = vld [vmem:[#allocation6 + $0x2c] sm:$0xf]
        %v300 = vld [vmem:[#allocation6 + $0x30] sm:$0xf]
        %v301 = vld [vmem:[#allocation6 + $0x34] sm:$0xf]
        %v302 = vld [vmem:[#allocation6 + $0x38] sm:$0xf]
        %v303 = vld [vmem:[#allocation6 + $0x3c] sm:$0xf]
        %v304 = vld [vmem:[#allocation6 + $0x40] sm:$0xf]
        %v305 = vld [vmem:[#allocation6 + $0x44] sm:$0xf]
        %v306 = vld [vmem:[#allocation6 + $0x48] sm:$0xf]
        %v307 = vld [vmem:[#allocation6 + $0x4c] sm:$0xf]
        %v308 = vld [vmem:[#allocation6 + $0x50] sm:$0xf]
        %v309 = vld [vmem:[#allocation6 + $0x54] sm:$0xf]
        %v310 = vld [vmem:[#allocation6 + $0x58] sm:$0xf]
        %v311 = vld [vmem:[#allocation6 + $0x5c] sm:$0xf]
        %v312 = vld [vmem:[#allocation6 + $0x60] sm:$0xf]
        %v313 = vld [vmem:[#allocation6 + $0x64] sm:$0xf]
        %v314 = vld [vmem:[#allocation6 + $0x68] sm:$0xf]
        %v315 = vld [vmem:[#allocation6 + $0x6c] sm:$0xf]
        %v316 = vld [vmem:[#allocation6 + $0x70] sm:$0xf]
        %v317 = vld [vmem:[#allocation6 + $0x74] sm:$0xf]
        %v318 = vld [vmem:[#allocation6 + $0x78] sm:$0xf]
        %v319 = vld [vmem:[#allocation6 + $0x7c] sm:$0xf]
        %v328 = vunpack.c.l.b16 %v280
        %v329 = vunpack.c.h.b16 %v280
        %v330 = vunpack.c.l.b16 %v281
        %v331 = vunpack.c.h.b16 %v281
        %v332 = vunpack.c.l.b16 %v282
        %v333 = vunpack.c.h.b16 %v282
        %v334 = vunpack.c.l.b16 %v283
        %v335 = vunpack.c.h.b16 %v283
        %v336 = vunpack.c.l.b16 %v284
        %v337 = vunpack.c.h.b16 %v284
        %v338 = vunpack.c.l.b16 %v285
        %v339 = vunpack.c.h.b16 %v285
        %v340 = vunpack.c.l.b16 %v286
        %v341 = vunpack.c.h.b16 %v286
        %v342 = vunpack.c.l.b16 %v287
        %v343 = vunpack.c.h.b16 %v287
        %v344 = vpack.c.b16 %v330, %v328
        %v345 = vpack.c.b16 %v331, %v329
        %v346 = vpack.c.b16 %v334, %v332
        %v347 = vpack.c.b16 %v335, %v333
        %v348 = vpack.c.b16 %v338, %v336
        %v349 = vpack.c.b16 %v339, %v337
        %v350 = vpack.c.b16 %v342, %v340
        %v351 = vpack.c.b16 %v343, %v341
        %v392 = vunpack.c.l.b16 %v288
        %v393 = vunpack.c.l.b16 %v289
        %v394 = vunpack.c.l.b16 %v290
        %v395 = vunpack.c.l.b16 %v291
        %v396 = vunpack.c.l.b16 %v292
        %v397 = vunpack.c.l.b16 %v293
        %v398 = vunpack.c.l.b16 %v294
        %v399 = vunpack.c.l.b16 %v295
        %v400 = vunpack.c.l.b16 %v296
        %v401 = vunpack.c.l.b16 %v297
        %v402 = vunpack.c.l.b16 %v298
        %v403 = vunpack.c.l.b16 %v299
        %v404 = vunpack.c.l.b16 %v300
        %v405 = vunpack.c.l.b16 %v301
        %v406 = vunpack.c.l.b16 %v302
        %v407 = vunpack.c.l.b16 %v303
        %v408 = vunpack.c.l.b16 %v304
        %v409 = vunpack.c.l.b16 %v305
        %v410 = vunpack.c.l.b16 %v306
        %v411 = vunpack.c.l.b16 %v307
        %v412 = vunpack.c.l.b16 %v308
        %v413 = vunpack.c.l.b16 %v309
        %v414 = vunpack.c.l.b16 %v310
        %v415 = vunpack.c.l.b16 %v311
        %v416 = vunpack.c.l.b16 %v312
        %v417 = vunpack.c.l.b16 %v313
        %v418 = vunpack.c.l.b16 %v314
        %v419 = vunpack.c.l.b16 %v315
        %v420 = vunpack.c.l.b16 %v316
        %v421 = vunpack.c.l.b16 %v317
        %v422 = vunpack.c.l.b16 %v318
        %v423 = vunpack.c.l.b16 %v319
        %v424 = vpack.c.b16 %v393, %v392
        %v425 = vpack.c.b16 %v395, %v394
        %v426 = vpack.c.b16 %v397, %v396
        %v427 = vpack.c.b16 %v399, %v398
        %v428 = vpack.c.b16 %v401, %v400
        %v429 = vpack.c.b16 %v403, %v402
        %v430 = vpack.c.b16 %v405, %v404
        %v431 = vpack.c.b16 %v407, %v406
        %v432 = vpack.c.b16 %v409, %v408
        %v433 = vpack.c.b16 %v411, %v410
        %v434 = vpack.c.b16 %v413, %v412
        %v435 = vpack.c.b16 %v415, %v414
        %v436 = vpack.c.b16 %v417, %v416
        %v437 = vpack.c.b16 %v419, %v418
        %v438 = vpack.c.b16 %v421, %v420
        %v439 = vpack.c.b16 %v423, %v422
        %456 = vmatprep.subr.bf16.mxu0 0
        %457 = vmatpush1.bf16.msra.mxu0 %v424
        %458 = vmatprep.subr.bf16.mxu0 0
        %459 = vmatpush1.bf16.msra.mxu0 %v425
        %460 = vmatprep.subr.bf16.mxu0 0
        %461 = vmatpush1.bf16.msra.mxu0 %v426
        %462 = vmatprep.subr.bf16.mxu0 0
        %463 = vmatpush1.bf16.msra.mxu0 %v427
        %464 = vmatprep.subr.bf16.mxu0 0
        %465 = vmatpush1.bf16.msra.mxu0 %v428
        %466 = vmatprep.subr.bf16.mxu0 0
        %467 = vmatpush1.bf16.msra.mxu0 %v429
        %468 = vmatprep.subr.bf16.mxu0 0
        %469 = vmatpush1.bf16.msra.mxu0 %v430
        %470 = vmatprep.subr.bf16.mxu0 0
        %471 = vmatpush1.bf16.msra.mxu0 %v431
        %472 = vmatprep.subr.bf16.mxu0 0
        %473 = vmatpush1.bf16.msra.mxu0 %v432
        %474 = vmatprep.subr.bf16.mxu0 0
        %475 = vmatpush1.bf16.msra.mxu0 %v433
        %476 = vmatprep.subr.bf16.mxu0 0
        %477 = vmatpush1.bf16.msra.mxu0 %v434
        %478 = vmatprep.subr.bf16.mxu0 0
        %479 = vmatpush1.bf16.msra.mxu0 %v435
        %480 = vmatprep.subr.bf16.mxu0 0
        %481 = vmatpush1.bf16.msra.mxu0 %v436
        %482 = vmatprep.subr.bf16.mxu0 0
        %483 = vmatpush1.bf16.msra.mxu0 %v437
        %484 = vmatprep.subr.bf16.mxu0 0
        %485 = vmatpush1.bf16.msra.mxu0 %v438
        %486 = vmatprep.subr.bf16.mxu0 0
        %487 = vmatpush1.bf16.msra.mxu0 %v439
        %488 = vmatprep.mubr.bf16.mxu0 %v345
        %489 = vmatmul.mubr.bf16.gmra.mrb[0].mxu0 %v344
        %v490 = vpop.f32.mrb[0].mxu0
        %v491 = vadd.f32 0.0, %v490
        %v492 = vpop.f32.mrb[0].mxu0
        %v493 = vpop.f32.mrb[0].mxu0
        %v494 = vadd.f32 0.0, %v493
        %v495 = vpop.f32.mrb[0].mxu0
        %496 = vmatprep.mubr.bf16.mxu0 %v347
        %497 = vmatmul.mubr.bf16.gmra.mrb[0].mxu0 %v346
        %v498 = vpop.f32.mrb[0].mxu0
        %v499 = vadd.f32 0.0, %v498
        %v500 = vpop.f32.mrb[0].mxu0
        %v501 = vpop.f32.mrb[0].mxu0
        %v502 = vadd.f32 0.0, %v501
        %v503 = vpop.f32.mrb[0].mxu0
        %504 = vmatprep.mubr.bf16.mxu0 %v349
        %505 = vmatmul.mubr.bf16.gmra.mrb[0].mxu0 %v348
        %v506 = vpop.f32.mrb[0].mxu0
        %v507 = vadd.f32 0.0, %v506
        %v508 = vpop.f32.mrb[0].mxu0
        %v509 = vpop.f32.mrb[0].mxu0
        %v510 = vadd.f32 0.0, %v509
        %v511 = vpop.f32.mrb[0].mxu0
        %512 = vmatprep.mubr.bf16.mxu0 %v351
        %513 = vmatmul.mubr.bf16.gmra.mrb[0].mxu0 %v350
        %v514 = vpop.f32.mrb[0].mxu0
        %v515 = vadd.f32 0.0, %v514
        %v516 = vpop.f32.mrb[0].mxu0
        %v517 = vpop.f32.mrb[0].mxu0
        %v518 = vadd.f32 0.0, %v517
        %v519 = vpop.f32.mrb[0].mxu0
        %520 = vdwg.mxu0
        %v521 = vadd.f32 %v272, %v491
        %v522 = vadd.f32 %v273, %v494
        %v523 = vadd.f32 %v274, %v499
        %v524 = vadd.f32 %v275, %v502
        %v525 = vadd.f32 %v276, %v507
        %v526 = vadd.f32 %v277, %v510
        %v527 = vadd.f32 %v278, %v515
        %v528 = vadd.f32 %v279, %v518
        %529 = vst [vmem:[#allocation2] sm:$0xff] %v521
        %530 = vst [vmem:[#allocation2 + $0x8] sm:$0xff] %v522
        %531 = vst [vmem:[#allocation2 + $0x10] sm:$0xff] %v523
        %532 = vst [vmem:[#allocation2 + $0x18] sm:$0xff] %v524
        %533 = vst [vmem:[#allocation2 + $0x20] sm:$0xff] %v525
        %534 = vst [vmem:[#allocation2 + $0x28] sm:$0xff] %v526
        %535 = vst [vmem:[#allocation2 + $0x30] sm:$0xff] %v527
        %536 = vst [vmem:[#allocation2 + $0x38] sm:$0xff] %v528
        // Predicated region
        $region45: #{tpu_custom_call.1} parent=31 // pred_check
          %p537 = pneg %p260
        $region46: #{tpu_custom_call.1} parent=31 // pred_check_branch
          %539 = sbr.rel (%p537) target = $region48
        $region47: #{tpu_custom_call.1} parent=31 // pred_region
          %v540 = vld [vmem:[#allocation2] sm:$0xff]
          %v541 = vld [vmem:[#allocation2 + $0x8] sm:$0xff]
          %v542 = vld [vmem:[#allocation2 + $0x10] sm:$0xff]
          %v543 = vld [vmem:[#allocation2 + $0x18] sm:$0xff]
          %v544 = vld [vmem:[#allocation2 + $0x20] sm:$0xff]
          %v545 = vld [vmem:[#allocation2 + $0x28] sm:$0xff]
          %v546 = vld [vmem:[#allocation2 + $0x30] sm:$0xff]
          %v547 = vld [vmem:[#allocation2 + $0x38] sm:$0xff]
          %v548 = vld [vmem:[%s257] sm:$0x1]
          %v550 = vlaneseq
          %v551 = vshrl.u32 %v550, 7
          %v552 = vsub.s32 0, %v551
          %v553 = vrot.slane %v548, %v552
          %v555 = vadd.f32 %v540, %v553
          %v556 = vadd.f32 %v541, %v553
          %v557 = vadd.f32 %v542, %v553
          %v558 = vadd.f32 %v543, %v553
          %v559 = vadd.f32 %v544, %v553
          %v560 = vadd.f32 %v545, %v553
          %v561 = vadd.f32 %v546, %v553
          %v562 = vadd.f32 %v547, %v553
          %v563 = vmax.f32 %v555, 0.0
          %v564 = vmax.f32 %v556, 0.0
          %v565 = vmax.f32 %v557, 0.0
          %v566 = vmax.f32 %v558, 0.0
          %v567 = vmax.f32 %v559, 0.0
          %v568 = vmax.f32 %v560, 0.0
          %v569 = vmax.f32 %v561, 0.0
          %v570 = vmax.f32 %v562, 0.0
          %571 = vst [vmem:[%s251] sm:$0xff] %v563
          %572 = vst [vmem:[%s251 + $0x8] sm:$0xff] %v564
          %573 = vst [vmem:[%s251 + $0x10] sm:$0xff] %v565
          %574 = vst [vmem:[%s251 + $0x18] sm:$0xff] %v566
          %575 = vst [vmem:[%s251 + $0x20] sm:$0xff] %v567
          %576 = vst [vmem:[%s251 + $0x28] sm:$0xff] %v568
          %577 = vst [vmem:[%s251 + $0x30] sm:$0xff] %v569
          %578 = vst [vmem:[%s251 + $0x38] sm:$0xff] %v570
        $region48: #{tpu_custom_call.1} parent=31 // pred_fallthru
          _
        %s579 = sand.u32 %s132, 1
        %s580 = scalar_lea.sflag [#allocation5], %s579
        %s581 = sand.u32 %s132, 1
        %s582 = smul.addr %s581, 64
        %s583 = scalar_lea.vmem [#allocation8], %s582
        // Predicated region
        $region49: #{tpu_custom_call.1} parent=31 // pred_check
          %p584 = pneg %p142
        $region50: #{tpu_custom_call.1} parent=31 // pred_check_branch
          %586 = sbr.rel (%p584) target = $region52
        $region51: #{tpu_custom_call.1} parent=31 // pred_region
          %s587 = smul.u32 8, %s26
          %s589 = ssub.s32 1024, 1024
          %590 = vsyncadd %s580, %s589
          %s591 = sadd.s32 %s27, %s587
          %s592 = smul.addr %s591, 128
          %s593 = scalar_lea.hbm %s3, %s592
          %s594 = sshll.u32 %s583, 4
          %s595 = int_to_ptr.vmem [resolvable:$true] %s594
          %600 = dma.vmem_to_hbm [thread:$0]  %s595, 1024, %s593, %s580, 128, 128, 8
        $region52: #{tpu_custom_call.1} parent=31 // pred_fallthru
          _
      $region32: #{tpu_custom_call.1} parent=5 // pred_fallthru
        _
      %p601 = scmp.le.s32.totalorder 2, %s16
      // Predicated region
      $region53: #{tpu_custom_call.1} parent=5 // pred_check
        %p602 = pneg %p601
      $region54: #{tpu_custom_call.1} parent=5 // pred_check_branch
        %604 = sbr.rel (%p602) target = $region56
      $region55: #{tpu_custom_call.1} parent=5 // pred_region
        %s605 = ssub.s32 %s16, 2
        // Predicated region
        $region57: #{tpu_custom_call.1} parent=55 // pred_check
          %p606 = pneg %p148
        $region58: #{tpu_custom_call.1} parent=55 // pred_check_branch
          %608 = sbr.rel (%p606) target = $region60
        $region59: #{tpu_custom_call.1} parent=55 // pred_region
          %s609 = sand.u32 %s133, 1
          %s610 = scalar_lea.sflag [#allocation5], %s609
          %s611 = sand.u32 %s133, 1
          %s612 = smul.addr %s611, 64
          %s613 = scalar_lea.vmem [#allocation8], %s612
          %614 = dma.done %s610, 1024
        $region60: #{tpu_custom_call.1} parent=55 // pred_fallthru
          _
      $region56: #{tpu_custom_call.1} parent=5 // pred_fallthru
        _
    $region6: #{tpu_custom_call.1} parent=1 // loop_footer
      %s20 = sadd.s32 1, %s16
    $region7: #{tpu_custom_call.1} parent=1 // loop_footer_branch
      %15 = sbr.rel target = $region3
    $region8: #{tpu_custom_call.1} parent=1 // loop_exit
      _
    %615 = vsyncpa [#allocation4], 1
    %s616 = scalar_lea.sflag [#allocation4], 1
    %617 = vsyncpa %s616, 1
    %618 = vsyncpa [#allocation7], 1
    %619 = vsyncpa [#allocation5], 1
    %s620 = scalar_lea.sflag [#allocation5], 1
    %621 = vsyncpa %s620, 1

</llo_original>
